<compile_context>
chip_gen: v7x
topology: tpu7x:2x2x1
jax: 0.10.0
libtpu: 0.0.40
codegen_flags: <defaults>
</compile_context>

<pallas_src>
import functools
import math

import jax
import jax.numpy as jnp
from jax.experimental import pallas as pl
from jax.experimental.pallas import tpu as pltpu


def _gelu_tanh(x):
    # PyTorch ACT2FN["gelu_new"] (tanh approximation); EUP tanh + VPU mul/add.
    c = math.sqrt(2.0 / math.pi)
    return 0.5 * x * (1.0 + jnp.tanh(c * (x + 0.044715 * x * x * x)))


def isspan_kernel(x_ref, wgi_ref, wo_ref, o_ref, *, d_ff):
    """Gated FFN hot path: fused input projection, gating, output projection."""
    x = x_ref[...]                                                      # (tm, d_in), native dtype
    # Single fused matmul for gate and wi projections; accumulate in f32 on the MXU.
    y = jnp.dot(x, wgi_ref[...], preferred_element_type=jnp.float32)   # (tm, 2*d_ff)
    gate = _gelu_tanh(y[:, :d_ff])                                      # f32 gating math
    h = y[:, d_ff:]
    z = (gate * h).astype(wo_ref.dtype)                                 # dropout(p=0) == identity
    o_ref[...] = jnp.dot(z, wo_ref[...],
                         preferred_element_type=jnp.float32).astype(o_ref.dtype)


def _round_up(a, b):
    return ((a + b - 1) // b) * b


@functools.partial(jax.jit, static_argnames=("tm",))
def isspan_forward(x, wgi_t, wo_t, tm=1024):
    """x: [B, N, d_in]; wgi_t: (d_in, 2*d_ff) = [Wg^T | Wi^T]; wo_t: (d_ff, num_types).

    Returns [B, N, num_types].
    """
    B, N, d_in = x.shape
    M = B * N
    d_ff = wgi_t.shape[1] // 2
    num_types = wo_t.shape[1]
    x2 = x.reshape(M, d_in)

    # Row tile: one grid step for small M; 512-2048-row tiles for large M.
    if M <= tm:
        tm_eff = _round_up(max(M, 1), 8)
    else:
        tm_eff = tm  # must be a multiple of 8 (default 1024)

    # Pad M so no tail rows are silently dropped.
    Mp = _round_up(M, tm_eff)
    if Mp != M:
        x2 = jnp.pad(x2, ((0, Mp - M), (0, 0)))

    out = pl.pallas_call(
        functools.partial(isspan_kernel, d_ff=d_ff),
        out_shape=jax.ShapeDtypeStruct((Mp, num_types), x.dtype),
        grid=(Mp // tm_eff,),
        in_specs=[
            pl.BlockSpec((tm_eff, d_in), lambda i: (i, 0)),        # activation row tile
            pl.BlockSpec((d_in, 2 * d_ff), lambda i: (0, 0)),      # fused gate|wi weight (resident)
            pl.BlockSpec((d_ff, num_types), lambda i: (0, 0)),     # wo weight (resident)
        ],
        out_specs=pl.BlockSpec((tm_eff, num_types), lambda i: (i, 0)),
        compiler_params=pltpu.CompilerParams(
            dimension_semantics=("parallel",)),                    # megacore-shardable on v7x
    )(x2, wgi_t, wo_t)

    return out[:M].reshape(B, N, num_types)


def _reference(x2, wg_t, wi_t, wo_t):
    xf = x2.astype(jnp.float32)
    gate = _gelu_tanh(xf @ wg_t.astype(jnp.float32))
    h = xf @ wi_t.astype(jnp.float32)
    return ((gate * h) @ wo_t.astype(jnp.float32)).astype(x2.dtype)


if __name__ == "__main__":
    # Config (small shapes consistent with the module)
    d_model, d_ff, num_types = 16, 32, 4
    d_in = 2 * d_model  # IsSpan uses in_channels=2 -> features = 2 * d_model

    key = jax.random.PRNGKey(0)
    kx, kg, ki, ko, kx2 = jax.random.split(key, 5)

    # Deterministic parameter init (Linear has bias=False in FFN).
    # torch.nn.Linear weight is (out, in); we store/pass the transpose (in, out).
    wg_t = jax.random.normal(kg, (d_in, d_ff), dtype=jnp.float32) / jnp.sqrt(d_in)
    wi_t = jax.random.normal(ki, (d_in, d_ff), dtype=jnp.float32) / jnp.sqrt(d_in)
    wo_t = jax.random.normal(ko, (d_ff, num_types), dtype=jnp.float32) / jnp.sqrt(d_ff)
    wgi_t = jnp.concatenate([wg_t, wi_t], axis=1)  # fused (d_in, 2*d_ff)

    ok = True

    # Case 1: B=2, N=8 -> M=16, single grid step.
    B, N = 2, 8
    x = jax.random.normal(kx, (B, N, d_in), dtype=jnp.float32)
    out = jax.block_until_ready(isspan_forward(x, wgi_t, wo_t))
    ref = _reference(x.reshape(B * N, d_in), wg_t, wi_t, wo_t).reshape(B, N, num_types)
    ok &= out.shape == (B, N, num_types)
    ok &= bool(jnp.allclose(out, ref, atol=1e-4, rtol=1e-4))

    # Case 2: B=3, N=5 -> M=15 (not a multiple of 8) exercises the padding/tail path.
    B2, N2 = 3, 5
    x2 = jax.random.normal(kx2, (B2, N2, d_in), dtype=jnp.float32)
    out2 = jax.block_until_ready(isspan_forward(x2, wgi_t, wo_t))
    ref2 = _reference(x2.reshape(B2 * N2, d_in), wg_t, wi_t, wo_t).reshape(B2, N2, num_types)
    ok &= out2.shape == (B2, N2, num_types)
    ok &= bool(jnp.allclose(out2, ref2, atol=1e-4, rtol=1e-4))

    assert ok, (float(jnp.max(jnp.abs(out - ref))), float(jnp.max(jnp.abs(out2 - ref2))))
    print("KERNEL_OK")
</pallas_src>

<mosaic_0001>
module attributes {stable_mosaic.version = 11 : i64} {
  func.func @isspan_kernel(%arg0: i32, %arg1: memref<16x32xf32, #tpu.memory_space<vmem>>, %arg2: memref<32x64xf32, #tpu.memory_space<vmem>>, %arg3: memref<32x4xf32, #tpu.memory_space<vmem>>, %arg4: memref<16x4xf32, #tpu.memory_space<vmem>>) attributes {dimension_semantics = [#tpu.dimension_semantics<parallel>], iteration_bounds = array<i64: 1>, scalar_prefetch = 0 : i64, scratch_operands = 0 : i64, tpu.core_type = #tpu.core_type<tc>, window_params = [{transform_indices = @transform_0, window_bounds = array<i64: 16, 32>}, {pipeline_mode = #tpu.pipeline_mode<synchronous>, transform_indices = @transform_1, window_bounds = array<i64: 32, 64>}, {pipeline_mode = #tpu.pipeline_mode<synchronous>, transform_indices = @transform_2, window_bounds = array<i64: 32, 4>}, {transform_indices = @transform_3, window_bounds = array<i64: 16, 4>}]} {
    %c0 = arith.constant 0 : index
    %c0_0 = arith.constant 0 : index
    %0 = vector.load %arg1[%c0, %c0_0] : memref<16x32xf32, #tpu.memory_space<vmem>>, vector<16x32xf32>
    %c0_1 = arith.constant 0 : index
    %c0_2 = arith.constant 0 : index
    %1 = vector.load %arg2[%c0_1, %c0_2] : memref<32x64xf32, #tpu.memory_space<vmem>>, vector<32x64xf32>
    %cst = arith.constant dense<0.000000e+00> : vector<16x64xf32>
    %2 = tpu.matmul %0, %1, %cst {dimension_numbers = #tpu.dot_dimension_numbers<[1], [0], [0], [1], [0, 0, 1, 1], [], []>} : vector<16x32xf32>, vector<32x64xf32>, vector<16x64xf32> -> vector<16x64xf32>
    %3 = vector.extract_strided_slice %2 {offsets = [0, 0], sizes = [16, 32], strides = [1, 1]} : vector<16x64xf32> to vector<16x32xf32>
    %cst_3 = arith.constant 5.000000e-01 : f32
    %4 = vector.broadcast %cst_3 : f32 to vector<16x32xf32>
    %5 = arith.mulf %4, %3 : vector<16x32xf32>
    %cst_4 = arith.constant 4.471500e-02 : f32
    %6 = vector.broadcast %cst_4 : f32 to vector<16x32xf32>
    %7 = arith.mulf %6, %3 : vector<16x32xf32>
    %8 = arith.mulf %7, %3 : vector<16x32xf32>
    %9 = arith.mulf %8, %3 : vector<16x32xf32>
    %10 = arith.addf %3, %9 : vector<16x32xf32>
    %cst_5 = arith.constant 0.797884583 : f32
    %11 = vector.broadcast %cst_5 : f32 to vector<16x32xf32>
    %12 = arith.mulf %11, %10 : vector<16x32xf32>
    %13 = math.tanh %12 : vector<16x32xf32>
    %cst_6 = arith.constant 1.000000e+00 : f32
    %14 = vector.broadcast %cst_6 : f32 to vector<16x32xf32>
    %15 = arith.addf %14, %13 : vector<16x32xf32>
    %16 = arith.mulf %5, %15 : vector<16x32xf32>
    %17 = vector.extract_strided_slice %2 {offsets = [0, 32], sizes = [16, 32], strides = [1, 1]} : vector<16x64xf32> to vector<16x32xf32>
    %18 = arith.mulf %16, %17 : vector<16x32xf32>
    %c0_7 = arith.constant 0 : index
    %c0_8 = arith.constant 0 : index
    %19 = vector.load %arg3[%c0_7, %c0_8] : memref<32x4xf32, #tpu.memory_space<vmem>>, vector<32x4xf32>
    %cst_9 = arith.constant dense<0.000000e+00> : vector<16x4xf32>
    %20 = tpu.matmul %18, %19, %cst_9 {dimension_numbers = #tpu.dot_dimension_numbers<[1], [0], [0], [1], [0, 0, 1, 1], [], []>} : vector<16x32xf32>, vector<32x4xf32>, vector<16x4xf32> -> vector<16x4xf32>
    %c0_10 = arith.constant 0 : index
    %c0_11 = arith.constant 0 : index
    %21 = vector.load %arg4[%c0_10, %c0_11] : memref<16x4xf32, #tpu.memory_space<vmem>>, vector<16x4xf32>
    tpu.vector_store %arg4[%c0_10, %c0_11], %20 {strides = array<i32>} : memref<16x4xf32, #tpu.memory_space<vmem>>, vector<16x4xf32>,
    return
  }
  func.func @transform_0(%arg0: i32) -> (i32, i32) {
    %c0_i32 = arith.constant 0 : i32
    %c0_i32_0 = arith.constant 0 : i32
    return %arg0, %c0_i32 : i32, i32
  }
  func.func @transform_1(%arg0: i32) -> (i32, i32) {
    %c0_i32 = arith.constant 0 : i32
    %c0_i32_0 = arith.constant 0 : i32
    %c0_i32_1 = arith.constant 0 : i32
    return %c0_i32, %c0_i32_0 : i32, i32
  }
  func.func @transform_2(%arg0: i32) -> (i32, i32) {
    %c0_i32 = arith.constant 0 : i32
    %c0_i32_0 = arith.constant 0 : i32
    %c0_i32_1 = arith.constant 0 : i32
    return %c0_i32, %c0_i32_0 : i32, i32
  }
  func.func @transform_3(%arg0: i32) -> (i32, i32) {
    %c0_i32 = arith.constant 0 : i32
    %c0_i32_0 = arith.constant 0 : i32
    return %arg0, %c0_i32 : i32, i32
  }
}

</mosaic_0001>

<llo_original>
// kernel: isspan_forward.1
$region0: #{isspan_forward.1}
  #allocation0 [shape = 'u32[]', space=smem, size = 0x4, offset = 0x4, fixed_abs, tag = 'smem constant byte address 0x4 - core index']
  #allocation1 [shape = 'u32[144,128]{1,0:T(1,128)}', space=vmem, size = 0x12000, scoped, tag = 'internal scratch']
  %s0 = inlined_call_operand.hbm [shape: f32[16,32], index: 0, kind: input, shape index: {}]
  %s1 = inlined_call_operand.vmem [shape: f32[32,64], index: 1, kind: input, shape index: {}]
  %s2 = inlined_call_operand.vmem [shape: f32[32,4], index: 2, kind: input, shape index: {}]
  %s3 = inlined_call_operand.vmem [shape: f32[16,4], index: 3, kind: output, shape index: {}]
  %s4 = sld [smem:[#allocation0]]
  $region26: #{isspan_forward.1} parent=0
    _
  %s6 = ssub.s32 1, %s4
  %s7 = scalar_select 0, %s6, %s4
  $region1: #{isspan_forward.1} parent=0
    #allocation2 [shape = 'u8[8192]{0}', space=vmem, size = 0x2000, scoped, tag = 'input window, operand 0, single buffered']
    #allocation3 [shape = 's32[1]{0}', space=sflag, size = 0x4, scoped, tag = 'scoped memory for isspan_forward.1']
    %8 = vsyncpa [#allocation3], 0
    // Predicated region
    $region2: #{isspan_forward.1} parent=1 // pred_check
      _
    $region3: #{isspan_forward.1} parent=1 // pred_check_branch
      %10 = sbr.rel (0) target = $region5
    $region4: #{isspan_forward.1} parent=1 // pred_region
      %s12 = ssub.s32 256, 256
      %13 = vsyncadd [#allocation3], %s12
      %s14 = sshll.u32 [#allocation2], 4
      %s15 = int_to_ptr.vmem [resolvable:$true] %s14
      %20 = dma.hbm_to_vmem [thread:$0]  %s0, 256, %s15, [#allocation3], 128, 128, 8
    $region5: #{isspan_forward.1} parent=1 // pred_fallthru
      _
    // Predicated region
    $region6: #{isspan_forward.1} parent=1 // pred_check
      _
    $region7: #{isspan_forward.1} parent=1 // pred_check_branch
      %22 = sbr.rel (0) target = $region9
    $region8: #{isspan_forward.1} parent=1 // pred_region
      _
    $region9: #{isspan_forward.1} parent=1 // pred_fallthru
      _
    // Predicated region
    $region10: #{isspan_forward.1} parent=1 // pred_check
      _
    $region11: #{isspan_forward.1} parent=1 // pred_check_branch
      %24 = sbr.rel (0) target = $region13
    $region12: #{isspan_forward.1} parent=1 // pred_region
      _
    $region13: #{isspan_forward.1} parent=1 // pred_fallthru
      _
    // Predicated region
    $region14: #{isspan_forward.1} parent=1 // pred_check
      _
    $region15: #{isspan_forward.1} parent=1 // pred_check_branch
      %26 = sbr.rel (0) target = $region17
    $region16: #{isspan_forward.1} parent=1 // pred_region
      %27 = dma.done [#allocation3], 256
    $region17: #{isspan_forward.1} parent=1 // pred_fallthru
      _
    %v28 = vld [vmem:[#allocation2] sm:$0xff]
    %v29 = vld [vmem:[#allocation2 + $0x8] sm:$0xff]
    %v30 = vld [vmem:[%s1] sm:$0xff]
    %v31 = vld [vmem:[%s1 + $0x8] sm:$0xff]
    %v32 = vld [vmem:[%s1 + $0x10] sm:$0xff]
    %v33 = vld [vmem:[%s1 + $0x18] sm:$0xff]
    %vm34 = vcmask 261120
    %v36 = vsel %vm34, %v28, 0
    %v39 = vsel %vm34, %v29, 0
    %41 = vmatprep.subr.mxu0 0.0
    %42 = vmatpush1.msra.mxu0 %v30
    %43 = vmatprep.subr.mxu0 0.0
    %44 = vmatpush1.msra.mxu0 %v31
    %45 = vmatprep.subr.mxu0 0.0
    %46 = vmatpush1.msra.mxu0 %v32
    %47 = vmatprep.subr.mxu0 0.0
    %48 = vmatpush1.msra.mxu0 %v33
    %49 = vmatprep.subr.mxu0 0.0
    %50 = vmatpush1.msra.mxu0 0.0
    %51 = vmatprep.subr.mxu0 0.0
    %52 = vmatpush1.msra.mxu0 0.0
    %53 = vmatprep.subr.mxu0 0.0
    %54 = vmatpush1.msra.mxu0 0.0
    %55 = vmatprep.subr.mxu0 0.0
    %56 = vmatpush1.msra.mxu0 0.0
    %57 = vmatprep.subr.mxu0 0.0
    %58 = vmatpush1.msra.mxu0 0.0
    %59 = vmatprep.subr.mxu0 0.0
    %60 = vmatpush1.msra.mxu0 0.0
    %61 = vmatprep.subr.mxu0 0.0
    %62 = vmatpush1.msra.mxu0 0.0
    %63 = vmatprep.subr.mxu0 0.0
    %64 = vmatpush1.msra.mxu0 0.0
    %65 = vmatprep.subr.mxu0 0.0
    %66 = vmatpush1.msra.mxu0 0.0
    %67 = vmatprep.subr.mxu0 0.0
    %68 = vmatpush1.msra.mxu0 0.0
    %69 = vmatprep.subr.mxu0 0.0
    %70 = vmatpush1.msra.mxu0 0.0
    %71 = vmatprep.subr.mxu0 0.0
    %72 = vmatpush1.msra.mxu0 0.0
    %73 = vmatprep.subr.mxu0 0.0
    %74 = vmatpush1.msra.mxu0 0.0
    %75 = vmatprep.subr.mxu0 0.0
    %76 = vmatpush1.msra.mxu0 0.0
    %77 = vmatprep.subr.mxu0 0.0
    %78 = vmatpush1.msra.mxu0 0.0
    %79 = vmatprep.subr.mxu0 0.0
    %80 = vmatpush1.msra.mxu0 0.0
    %81 = vmatprep.subr.mxu0 0.0
    %82 = vmatpush1.msra.mxu0 0.0
    %83 = vmatprep.subr.mxu0 0.0
    %84 = vmatpush1.msra.mxu0 0.0
    %85 = vmatprep.subr.mxu0 0.0
    %86 = vmatpush1.msra.mxu0 0.0
    %87 = vmatprep.subr.mxu0 0.0
    %88 = vmatpush1.msra.mxu0 0.0
    %89 = vmatprep.subr.mxu0 0.0
    %90 = vmatpush1.msra.mxu0 0.0
    %91 = vmatprep.subr.mxu0 0.0
    %92 = vmatpush1.msra.mxu0 0.0
    %93 = vmatprep.subr.mxu0 0.0
    %94 = vmatpush1.msra.mxu0 0.0
    %95 = vmatprep.subr.mxu0 0.0
    %96 = vmatpush1.msra.mxu0 0.0
    %97 = vmatprep.subr.mxu0 0.0
    %98 = vmatpush1.msra.mxu0 0.0
    %99 = vmatprep.subr.mxu0 0.0
    %100 = vmatpush1.msra.mxu0 0.0
    %101 = vmatprep.subr.mxu0 0.0
    %102 = vmatpush1.msra.mxu0 0.0
    %103 = vmatprep.subr.mxu0 0.0
    %104 = vmatpush1.msra.mxu0 0.0
    %105 = vmatprep.mubr.f32.mxu0 0.0
    %106 = vmatmul.mubr.f32.gmra.mrb[0].mxu0 %v36
    %v107 = vpop.f32.mrb[0].mxu0
    %v108 = vadd.f32 0.0, %v107
    %v109 = vpop.f32.mrb[0].mxu0
    %110 = vmatprep.mubr.f32.mxu0 0.0
    %111 = vmatmul.mubr.f32.gmra.mrb[0].mxu0 %v39
    %v112 = vpop.f32.mrb[0].mxu0
    %v113 = vadd.f32 0.0, %v112
    %v114 = vpop.f32.mrb[0].mxu0
    %115 = vdwg.mxu0
    %v116 = vmul.f32 %v108, 0.5
    %v117 = vmul.f32 %v113, 0.5
    %v118 = vmul.f32 %v108, 0.044715
    %v119 = vmul.f32 %v113, 0.044715
    %v120 = vmul.f32 %v118, %v108
    %v121 = vmul.f32 %v119, %v113
    %v122 = vmul.f32 %v120, %v108
    %v123 = vmul.f32 %v121, %v113
    %v124 = vadd.f32 %v108, %v122
    %v125 = vadd.f32 %v113, %v123
    %v126 = vmul.f32 %v124, 0.7978846
    %v127 = vmul.f32 %v125, 0.7978846
    %v128 = vtanh.pop %v126
    %v129 = vtanh.pop %v127
    %v130 = vadd.f32 %v128, 1.0
    %v131 = vadd.f32 %v129, 1.0
    %v132 = vmul.f32 %v116, %v130
    %v133 = vmul.f32 %v117, %v131
    %136 = vrot.lane.b32.xlu0 %v108, 96
    %v137 = vpop.permute.xlu0 %136
    %138 = vrot.lane.b32.xlu0 %v113, 96
    %v139 = vpop.permute.xlu0 %138
    %v142 = vmul.f32 %v132, %v137
    %v143 = vmul.f32 %v133, %v139
    %v144 = vld [vmem:[%s2] sm:$0xff]
    %v145 = vld [vmem:[%s2 + $0x8] sm:$0xff]
    %v146 = vld [vmem:[%s2 + $0x10] sm:$0xff]
    %v147 = vld [vmem:[%s2 + $0x18] sm:$0xff]
    %v149 = vsel %vm34, %v142, 0
    %v152 = vsel %vm34, %v143, 0
    %154 = vmatprep.subr.mxu0 0.0
    %155 = vmatpush1.msra.mxu0 %v144
    %156 = vmatprep.subr.mxu0 0.0
    %157 = vmatpush1.msra.mxu0 %v145
    %158 = vmatprep.subr.mxu0 0.0
    %159 = vmatpush1.msra.mxu0 %v146
    %160 = vmatprep.subr.mxu0 0.0
    %161 = vmatpush1.msra.mxu0 %v147
    %162 = vmatprep.subr.mxu0 0.0
    %163 = vmatpush1.msra.mxu0 0.0
    %164 = vmatprep.subr.mxu0 0.0
    %165 = vmatpush1.msra.mxu0 0.0
    %166 = vmatprep.subr.mxu0 0.0
    %167 = vmatpush1.msra.mxu0 0.0
    %168 = vmatprep.subr.mxu0 0.0
    %169 = vmatpush1.msra.mxu0 0.0
    %170 = vmatprep.subr.mxu0 0.0
    %171 = vmatpush1.msra.mxu0 0.0
    %172 = vmatprep.subr.mxu0 0.0
    %173 = vmatpush1.msra.mxu0 0.0
    %174 = vmatprep.subr.mxu0 0.0
    %175 = vmatpush1.msra.mxu0 0.0
    %176 = vmatprep.subr.mxu0 0.0
    %177 = vmatpush1.msra.mxu0 0.0
    %178 = vmatprep.subr.mxu0 0.0
    %179 = vmatpush1.msra.mxu0 0.0
    %180 = vmatprep.subr.mxu0 0.0
    %181 = vmatpush1.msra.mxu0 0.0
    %182 = vmatprep.subr.mxu0 0.0
    %183 = vmatpush1.msra.mxu0 0.0
    %184 = vmatprep.subr.mxu0 0.0
    %185 = vmatpush1.msra.mxu0 0.0
    %186 = vmatprep.subr.mxu0 0.0
    %187 = vmatpush1.msra.mxu0 0.0
    %188 = vmatprep.subr.mxu0 0.0
    %189 = vmatpush1.msra.mxu0 0.0
    %190 = vmatprep.subr.mxu0 0.0
    %191 = vmatpush1.msra.mxu0 0.0
    %192 = vmatprep.subr.mxu0 0.0
    %193 = vmatpush1.msra.mxu0 0.0
    %194 = vmatprep.subr.mxu0 0.0
    %195 = vmatpush1.msra.mxu0 0.0
    %196 = vmatprep.subr.mxu0 0.0
    %197 = vmatpush1.msra.mxu0 0.0
    %198 = vmatprep.subr.mxu0 0.0
    %199 = vmatpush1.msra.mxu0 0.0
    %200 = vmatprep.subr.mxu0 0.0
    %201 = vmatpush1.msra.mxu0 0.0
    %202 = vmatprep.subr.mxu0 0.0
    %203 = vmatpush1.msra.mxu0 0.0
    %204 = vmatprep.subr.mxu0 0.0
    %205 = vmatpush1.msra.mxu0 0.0
    %206 = vmatprep.subr.mxu0 0.0
    %207 = vmatpush1.msra.mxu0 0.0
    %208 = vmatprep.subr.mxu0 0.0
    %209 = vmatpush1.msra.mxu0 0.0
    %210 = vmatprep.subr.mxu0 0.0
    %211 = vmatpush1.msra.mxu0 0.0
    %212 = vmatprep.subr.mxu0 0.0
    %213 = vmatpush1.msra.mxu0 0.0
    %214 = vmatprep.subr.mxu0 0.0
    %215 = vmatpush1.msra.mxu0 0.0
    %216 = vmatprep.subr.mxu0 0.0
    %217 = vmatpush1.msra.mxu0 0.0
    %218 = vmatprep.mubr.f32.mxu0 0.0
    %219 = vmatmul.mubr.f32.gmra.mrb[0].mxu0 %v149
    %v220 = vpop.f32.mrb[0].mxu0
    %v221 = vadd.f32 0.0, %v220
    %v222 = vpop.f32.mrb[0].mxu0
    %223 = vmatprep.mubr.f32.mxu0 0.0
    %224 = vmatmul.mubr.f32.gmra.mrb[0].mxu0 %v152
    %v225 = vpop.f32.mrb[0].mxu0
    %v226 = vadd.f32 0.0, %v225
    %v227 = vpop.f32.mrb[0].mxu0
    %228 = vdwg.mxu0
    %vm229 = vcmask 31744
    %230 = vst.msk [vmem:[%s3] sm:$0xff] %vm229, %v221
    %231 = vst.msk [vmem:[%s3 + $0x8] sm:$0xff] %vm229, %v226
    // Predicated region
    $region18: #{isspan_forward.1} parent=1 // pred_check
      _
    $region19: #{isspan_forward.1} parent=1 // pred_check_branch
      %233 = sbr.rel (0) target = $region21
    $region20: #{isspan_forward.1} parent=1 // pred_region
      _
    $region21: #{isspan_forward.1} parent=1 // pred_fallthru
      _
    // Predicated region
    $region22: #{isspan_forward.1} parent=1 // pred_check
      _
    $region23: #{isspan_forward.1} parent=1 // pred_check_branch
      %235 = sbr.rel (0) target = $region25
    $region24: #{isspan_forward.1} parent=1 // pred_region
      _
    $region25: #{isspan_forward.1} parent=1 // pred_fallthru
      _
    %236 = vsyncpa [#allocation3], 1

</llo_original>
